<compile_context>
chip_gen: v7x
topology: tpu7x:2x2x1
jax: 0.10.0
libtpu: 0.0.40
codegen_flags: <defaults>
</compile_context>

<pallas_src>
import jax
import jax.numpy as jnp
from jax.experimental import pallas as pl
from jax.experimental.pallas import tpu as pltpu

_LANES = 128  # every slab row / dense output is padded to one 128-lane vreg row


def _round8(n):
    return -(-n // 8) * 8


def make_layout(input_shape, n_actions, n_cluster, goal_repr_dim, rnn_hidden_dim):
    """Static row layout of the single packed weight slab (all offsets %8 == 0)."""
    NC, G, H, A = n_cluster, goal_repr_dim, rnn_hidden_dim, n_actions
    IN_W = input_shape + n_actions          # `inputs` = obs + last-action one-hot
    assert 3 * H <= _LANES, "fused GRU gate width 3H must fit one 128-lane pass (v5e)"
    assert G <= _LANES and A <= _LANES and NC <= _LANES and H <= _LANES

    off, cur = {}, 0
    for name, rows in [("g1w", NC), ("g2w", G), ("f1w", IN_W + G),
                       ("w_i", H), ("w_h", H), ("f2w", H), ("bias", 8)]:
        off[name] = cur
        cur += _round8(rows)
    return dict(NC=NC, G=G, IN_W=IN_W, H=H, A=A, rows=cur, off=off)


def _make_kernels(L):
    NC, G, IN_W, H = L["NC"], L["G"], L["IN_W"], L["H"]
    off = L["off"]

    # ---------------- kernel A: non-recurrent precompute (batched over T*B) --
    def precompute_kernel(x_ref, goal_ref, slab_ref, gi_ref):
        x_in = x_ref[...]                                     # [TB, IN_W]
        goal = goal_ref[...]                                  # [TB, NC]

        g1w = slab_ref[off["g1w"]:off["g1w"] + NC, :G]        # [NC, G]
        g2w = slab_ref[off["g2w"]:off["g2w"] + G, :G]         # [G, G]
        f1w = slab_ref[off["f1w"]:off["f1w"] + IN_W + G, :H]  # [IN_W+G, H]
        w_i = slab_ref[off["w_i"]:off["w_i"] + H, :]          # [H, 128] (cols 3H: zero)
        b = slab_ref[off["bias"]:off["bias"] + 8, :]          # [8, 128]
        g1b, g2b, f1b = b[0:1, :G], b[1:2, :G], b[2:3, :H]
        b_i = b[3:4, :]                                       # [1, 128] (pad zero)

        # goal_repr_Gnet: Linear -> ReLU -> Linear
        ge = jnp.dot(goal, g1w, preferred_element_type=jnp.float32) + g1b
        ge = jnp.maximum(ge, 0.0)
        ge = jnp.dot(ge, g2w, preferred_element_type=jnp.float32) + g2b

        # x = relu(fc1(concat(inputs, goal_embed)))  (concat folded into 2 dots)
        x = (jnp.dot(x_in, f1w[:IN_W], preferred_element_type=jnp.float32)
             + jnp.dot(ge, f1w[IN_W:], preferred_element_type=jnp.float32)
             + f1b)
        x = jnp.maximum(x, 0.0)

        # gi = x @ [Wir|Wiz|Win] + [bir|biz|bin], lane-padded to 128
        gi_ref[...] = jnp.dot(x, w_i, preferred_element_type=jnp.float32) + b_i

    # ---------------- kernel B: serial GRU recurrence + fc2, grid=(T,) -------
    def recurrent_kernel(h0_ref, gi_ref, slab_ref, q_ref, h_out_ref, h_scr):
        t = pl.program_id(0)

        @pl.when(t == 0)
        def _():
            h_scr[...] = h0_ref[...]                          # seed carried state

        h_prev = h_scr[...]                                   # [B, H]
        w_h = slab_ref[off["w_h"]:off["w_h"] + H, :]          # [H, 128] (cols 3H: zero)
        f2w = slab_ref[off["f2w"]:off["f2w"] + H, :]          # [H, 128] (cols A: zero)
        b = slab_ref[off["bias"]:off["bias"] + 8, :]
        b_h, f2b = b[4:5, :], b[5:6, :]                       # [1, 128] each

        gi = gi_ref[0]                                        # [B, 128]
        gh = jnp.dot(h_prev, w_h, preferred_element_type=jnp.float32) + b_h

        # PyTorch GRUCell semantics (gate order r | z | n); all f32 VPU/EUP math.
        r = jax.nn.sigmoid(gi[:, 0:H] + gh[:, 0:H])
        z = jax.nn.sigmoid(gi[:, H:2 * H] + gh[:, H:2 * H])
        n = jnp.tanh(gi[:, 2 * H:3 * H] + r * gh[:, 2 * H:3 * H])
        h_new = (1.0 - z) * n + z * h_prev

        h_scr[...] = h_new
        q_ref[0] = jnp.dot(h_new, f2w, preferred_element_type=jnp.float32) + f2b

        @pl.when(t == pl.num_programs(0) - 1)
        def _():
            h_out_ref[...] = h_new                            # single HBM writeback

    return precompute_kernel, recurrent_kernel


def tactic_gc_rollout(inputs_seq, hidden0, goals_seq, slab, layout):
    """Apply the module forward T times sequentially.

    inputs_seq: [T, B, IN_W], hidden0: [B, H], goals_seq: [T, B, NC]
    Returns (q_seq [T, B, A], h_final [B, H]).
    """
    T, B, IN_W = inputs_seq.shape
    NC = goals_seq.shape[-1]
    H, A, ROWS = layout["H"], layout["A"], layout["rows"]
    assert IN_W == layout["IN_W"] and NC == layout["NC"] and hidden0.shape == (B, H)

    pre_k, rec_k = _make_kernels(layout)
    vmem = pl.BlockSpec(memory_space=pltpu.MemorySpace.VMEM)
    TB = T * B
    G = layout["G"]

    # ---- kernel A: batched non-recurrent work ([T*B, .] matmuls) -----------
    flops_pre = int(2 * TB * (NC * G + G * G + IN_W * H + G * H + H * _LANES))
    bytes_pre = int(4 * (TB * IN_W + TB * NC + ROWS * _LANES + TB * _LANES))
    gi_flat = pl.pallas_call(
        pre_k,
        out_shape=jax.ShapeDtypeStruct((TB, _LANES), jnp.float32),
        in_specs=[vmem, vmem, vmem],
        out_specs=vmem,
        cost_estimate=pl.CostEstimate(
            flops=flops_pre, transcendentals=0, bytes_accessed=bytes_pre),
    )(inputs_seq.reshape(TB, IN_W), goals_seq.reshape(TB, NC), slab)
    gi_seq = gi_flat.reshape(T, B, _LANES)

    # ---- kernel B: serial recurrence over grid=(T,) -------------------------
    flops_rec = int(T * (2 * B * H * _LANES * 2 + 12 * B * H))
    trans_rec = int(T * 3 * B * H)
    bytes_rec = int(4 * (B * H + T * B * _LANES + ROWS * _LANES
                         + T * B * _LANES + B * H))
    q_pad, h_final = pl.pallas_call(
        rec_k,
        out_shape=(jax.ShapeDtypeStruct((T, B, _LANES), jnp.float32),
                   jax.ShapeDtypeStruct((B, H), jnp.float32)),
        grid_spec=pltpu.PrefetchScalarGridSpec(
            num_scalar_prefetch=0,
            grid=(T,),
            in_specs=[
                pl.BlockSpec((B, H), lambda t: (0, 0)),            # h0 (resident)
                pl.BlockSpec((1, B, _LANES), lambda t: (t, 0, 0)),  # gi per step
                pl.BlockSpec((ROWS, _LANES), lambda t: (0, 0)),     # weights (resident)
            ],
            out_specs=[
                pl.BlockSpec((1, B, _LANES), lambda t: (t, 0, 0)),  # q per step, lane-dense
                pl.BlockSpec((B, H), lambda t: (0, 0)),             # h written at t==T-1
            ],
            scratch_shapes=[pltpu.VMEM((B, H), jnp.float32)],       # carried hidden state
        ),
        compiler_params=pltpu.CompilerParams(dimension_semantics=("arbitrary",)),
        cost_estimate=pl.CostEstimate(
            flops=flops_rec, transcendentals=trans_rec, bytes_accessed=bytes_rec),
    )(hidden0, gi_seq, slab)

    return q_pad[..., :A], h_final


def tactic_gc_forward(inputs, hidden_state, goal_one_hot, slab, layout):
    """Single-step forward with the exact semantics of TACTICAgent_GC.forward()."""
    q, h = tactic_gc_rollout(inputs[None], hidden_state, goal_one_hot[None],
                             slab, layout)
    return q[0], h


# --------------------------- parameter packing ------------------------------
def make_params(key, input_shape, n_actions, n_cluster, goal_repr_dim,
                rnn_hidden_dim):
    """Deterministic synthetic parameters packed into ONE 128-lane slab."""
    L = make_layout(input_shape, n_actions, n_cluster, goal_repr_dim, rnn_hidden_dim)
    NC, G, IN_W, H, A = L["NC"], L["G"], L["IN_W"], L["H"], L["A"]
    ks = jax.random.split(key, 20)
    s = 0.1
    w = lambda k, shape: (s * jax.random.normal(k, shape)).astype(jnp.float32)

    g1w, g1b = w(ks[0], (NC, G)), w(ks[1], (G,))
    g2w, g2b = w(ks[2], (G, G)), w(ks[3], (G,))
    f1w, f1b = w(ks[4], (IN_W + G, H)), w(ks[5], (H,))
    w_i = jnp.concatenate([w(ks[6], (H, H)), w(ks[7], (H, H)), w(ks[8], (H, H))], axis=1)
    b_i = jnp.concatenate([w(ks[9], (H,)), w(ks[10], (H,)), w(ks[11], (H,))])
    w_h = jnp.concatenate([w(ks[12], (H, H)), w(ks[13], (H, H)), w(ks[14], (H, H))], axis=1)
    b_h = jnp.concatenate([w(ks[15], (H,)), w(ks[16], (H,)), w(ks[17], (H,))])
    f2w, f2b = w(ks[18], (H, A)), w(ks[19], (A,))

    slab = jnp.zeros((L["rows"], _LANES), jnp.float32)

    def put(sl, name, mat):
        r0 = L["off"][name]
        return sl.at[r0:r0 + mat.shape[0], :mat.shape[1]].set(mat)

    slab = put(slab, "g1w", g1w)
    slab = put(slab, "g2w", g2w)
    slab = put(slab, "f1w", f1w)
    slab = put(slab, "w_i", w_i)          # [H, 3H], cols 3H:128 stay zero
    slab = put(slab, "w_h", w_h)
    slab = put(slab, "f2w", f2w)          # [H, A], cols A:128 stay zero

    bias = jnp.zeros((8, _LANES), jnp.float32)
    bias = bias.at[0, :G].set(g1b).at[1, :G].set(g2b).at[2, :H].set(f1b)
    bias = bias.at[3, :3 * H].set(b_i).at[4, :3 * H].set(b_h).at[5, :A].set(f2b)
    r0 = L["off"]["bias"]
    slab = slab.at[r0:r0 + 8, :].set(bias)
    return slab, L


# --------------------------- pure-JAX reference -----------------------------
def reference_step(inputs, hidden, goal, slab, L):
    NC, G, IN_W, H, A = L["NC"], L["G"], L["IN_W"], L["H"], L["A"]
    off = L["off"]
    g1w = slab[off["g1w"]:off["g1w"] + NC, :G]
    g2w = slab[off["g2w"]:off["g2w"] + G, :G]
    f1w = slab[off["f1w"]:off["f1w"] + IN_W + G, :H]
    w_i = slab[off["w_i"]:off["w_i"] + H, :3 * H]
    w_h = slab[off["w_h"]:off["w_h"] + H, :3 * H]
    f2w = slab[off["f2w"]:off["f2w"] + H, :A]
    b = slab[off["bias"]:off["bias"] + 8, :]
    g1b, g2b, f1b = b[0:1, :G], b[1:2, :G], b[2:3, :H]
    b_i, b_h, f2b = b[3:4, :3 * H], b[4:5, :3 * H], b[5:6, :A]

    ge = jnp.maximum(goal @ g1w + g1b, 0.0) @ g2w + g2b
    x = jnp.maximum(inputs @ f1w[:IN_W] + ge @ f1w[IN_W:] + f1b, 0.0)
    gi = x @ w_i + b_i
    gh = hidden @ w_h + b_h
    r = jax.nn.sigmoid(gi[:, :H] + gh[:, :H])
    z = jax.nn.sigmoid(gi[:, H:2 * H] + gh[:, H:2 * H])
    n = jnp.tanh(gi[:, 2 * H:] + r * gh[:, 2 * H:])
    h = (1.0 - z) * n + z * hidden
    q = h @ f2w + f2b
    return q, h


if __name__ == "__main__":
    # Small config consistent with the module's forward().
    T, B = 8, 8                       # rollout length, batch (= n_agents * env batch)
    input_shape = 24                  # base obs width
    n_actions = 8
    n_cluster = 8
    goal_repr_dim = 16
    rnn_hidden_dim = 32
    IN_W = input_shape + n_actions    # inputs carry obs + last-action one-hot

    key = jax.random.PRNGKey(0)
    k_p, k_x, k_h, k_g = jax.random.split(key, 4)
    slab, layout = make_params(k_p, input_shape, n_actions, n_cluster,
                               goal_repr_dim, rnn_hidden_dim)

    inputs_seq = jax.random.normal(k_x, (T, B, IN_W), dtype=jnp.float32)
    hidden0 = jax.random.normal(k_h, (B, rnn_hidden_dim), dtype=jnp.float32)
    goal_ids = jax.random.randint(k_g, (T, B), 0, n_cluster)
    goals_seq = jax.nn.one_hot(goal_ids, n_cluster, dtype=jnp.float32)

    # Pure-JAX reference rollout (module forward applied T times).
    q_ref_steps, h = [], hidden0
    for t in range(T):
        q_t, h = reference_step(inputs_seq[t], h, goals_seq[t], slab, layout)
        q_ref_steps.append(q_t)
    q_ref = jnp.stack(q_ref_steps)
    h_ref = h
    q_ref, h_ref = jax.block_until_ready((q_ref, h_ref))

    # Pallas rollout.
    q, h_fin = tactic_gc_rollout(inputs_seq, hidden0, goals_seq, slab, layout)
    q, h_fin = jax.block_until_ready((q, h_fin))

    assert q.shape == (T, B, n_actions) and h_fin.shape == (B, rnn_hidden_dim)
    # Tolerance covers MXU default-precision differences between XLA and Mosaic.
    assert jnp.allclose(q, q_ref, atol=2e-3, rtol=2e-3), "q rollout mismatch vs reference"
    assert jnp.allclose(h_fin, h_ref, atol=2e-3, rtol=2e-3), "h rollout mismatch vs reference"

    # Single-step forward (exact module semantics, T=1).
    q1, h1 = tactic_gc_forward(inputs_seq[0], hidden0, goals_seq[0], slab, layout)
    q1, h1 = jax.block_until_ready((q1, h1))
    q1_ref, h1_ref = reference_step(inputs_seq[0], hidden0, goals_seq[0], slab, layout)
    assert jnp.allclose(q1, q1_ref, atol=2e-3, rtol=2e-3), "q single-step mismatch"
    assert jnp.allclose(h1, h1_ref, atol=2e-3, rtol=2e-3), "h single-step mismatch"

    print("KERNEL_OK")
</pallas_src>

<mosaic_0001>
module attributes {stable_mosaic.version = 11 : i64} {
  func.func @precompute_kernel(%arg0: memref<64x32xf32, #tpu.memory_space<vmem>>, %arg1: memref<64x8xf32, #tpu.memory_space<vmem>>, %arg2: memref<176x128xf32, #tpu.memory_space<vmem>>, %arg3: memref<64x128xf32, #tpu.memory_space<vmem>>) attributes {dimension_semantics = [], scalar_prefetch = 0 : i64, scratch_operands = 0 : i64, tpu.core_type = #tpu.core_type<tc>} {
    %c0 = arith.constant 0 : index
    %c0_0 = arith.constant 0 : index
    %0 = vector.load %arg0[%c0, %c0_0] : memref<64x32xf32, #tpu.memory_space<vmem>>, vector<64x32xf32>
    %c0_1 = arith.constant 0 : index
    %c0_2 = arith.constant 0 : index
    %1 = vector.load %arg1[%c0_1, %c0_2] : memref<64x8xf32, #tpu.memory_space<vmem>>, vector<64x8xf32>
    %c0_3 = arith.constant 0 : index
    %c0_4 = arith.constant 0 : index
    %2 = vector.load %arg2[%c0_3, %c0_4] : memref<176x128xf32, #tpu.memory_space<vmem>>, vector<8x16xf32>
    %c8 = arith.constant 8 : index
    %c0_5 = arith.constant 0 : index
    %3 = vector.load %arg2[%c8, %c0_5] : memref<176x128xf32, #tpu.memory_space<vmem>>, vector<16x16xf32>
    %c24 = arith.constant 24 : index
    %c0_6 = arith.constant 0 : index
    %4 = vector.load %arg2[%c24, %c0_6] : memref<176x128xf32, #tpu.memory_space<vmem>>, vector<48x32xf32>
    %c72 = arith.constant 72 : index
    %c0_7 = arith.constant 0 : index
    %5 = vector.load %arg2[%c72, %c0_7] : memref<176x128xf32, #tpu.memory_space<vmem>>, vector<32x128xf32>
    %c168 = arith.constant 168 : index
    %c0_8 = arith.constant 0 : index
    %6 = vector.load %arg2[%c168, %c0_8] : memref<176x128xf32, #tpu.memory_space<vmem>>, vector<8x128xf32>
    %7 = vector.extract_strided_slice %6 {offsets = [0, 0], sizes = [1, 16], strides = [1, 1]} : vector<8x128xf32> to vector<1x16xf32>
    %8 = vector.extract_strided_slice %6 {offsets = [1, 0], sizes = [1, 16], strides = [1, 1]} : vector<8x128xf32> to vector<1x16xf32>
    %9 = vector.extract_strided_slice %6 {offsets = [2, 0], sizes = [1, 32], strides = [1, 1]} : vector<8x128xf32> to vector<1x32xf32>
    %10 = vector.extract_strided_slice %6 {offsets = [3, 0], sizes = [1, 128], strides = [1, 1]} : vector<8x128xf32> to vector<1x128xf32>
    %cst = arith.constant dense<0.000000e+00> : vector<64x16xf32>
    %11 = tpu.matmul %1, %2, %cst {dimension_numbers = #tpu.dot_dimension_numbers<[1], [0], [0], [1], [0, 0, 1, 1], [], []>} : vector<64x8xf32>, vector<8x16xf32>, vector<64x16xf32> -> vector<64x16xf32>
    %12 = vector.broadcast %7 : vector<1x16xf32> to vector<64x16xf32>
    %13 = arith.addf %11, %12 : vector<64x16xf32>
    %cst_9 = arith.constant 0.000000e+00 : f32
    %14 = vector.broadcast %cst_9 : f32 to vector<64x16xf32>
    %15 = arith.maximumf %13, %14 : vector<64x16xf32>
    %cst_10 = arith.constant dense<0.000000e+00> : vector<64x16xf32>
    %16 = tpu.matmul %15, %3, %cst_10 {dimension_numbers = #tpu.dot_dimension_numbers<[1], [0], [0], [1], [0, 0, 1, 1], [], []>} : vector<64x16xf32>, vector<16x16xf32>, vector<64x16xf32> -> vector<64x16xf32>
    %17 = vector.broadcast %8 : vector<1x16xf32> to vector<64x16xf32>
    %18 = arith.addf %16, %17 : vector<64x16xf32>
    %19 = vector.extract_strided_slice %4 {offsets = [0, 0], sizes = [32, 32], strides = [1, 1]} : vector<48x32xf32> to vector<32x32xf32>
    %cst_11 = arith.constant dense<0.000000e+00> : vector<64x32xf32>
    %20 = tpu.matmul %0, %19, %cst_11 {dimension_numbers = #tpu.dot_dimension_numbers<[1], [0], [0], [1], [0, 0, 1, 1], [], []>} : vector<64x32xf32>, vector<32x32xf32>, vector<64x32xf32> -> vector<64x32xf32>
    %21 = vector.extract_strided_slice %4 {offsets = [32, 0], sizes = [16, 32], strides = [1, 1]} : vector<48x32xf32> to vector<16x32xf32>
    %cst_12 = arith.constant dense<0.000000e+00> : vector<64x32xf32>
    %22 = tpu.matmul %18, %21, %cst_12 {dimension_numbers = #tpu.dot_dimension_numbers<[1], [0], [0], [1], [0, 0, 1, 1], [], []>} : vector<64x16xf32>, vector<16x32xf32>, vector<64x32xf32> -> vector<64x32xf32>
    %23 = arith.addf %20, %22 : vector<64x32xf32>
    %24 = vector.broadcast %9 : vector<1x32xf32> to vector<64x32xf32>
    %25 = arith.addf %23, %24 : vector<64x32xf32>
    %cst_13 = arith.constant 0.000000e+00 : f32
    %26 = vector.broadcast %cst_13 : f32 to vector<64x32xf32>
    %27 = arith.maximumf %25, %26 : vector<64x32xf32>
    %cst_14 = arith.constant dense<0.000000e+00> : vector<64x128xf32>
    %28 = tpu.matmul %27, %5, %cst_14 {dimension_numbers = #tpu.dot_dimension_numbers<[1], [0], [0], [1], [0, 0, 1, 1], [], []>} : vector<64x32xf32>, vector<32x128xf32>, vector<64x128xf32> -> vector<64x128xf32>
    %29 = vector.broadcast %10 : vector<1x128xf32> to vector<64x128xf32>
    %30 = arith.addf %28, %29 : vector<64x128xf32>
    %c0_15 = arith.constant 0 : index
    %c0_16 = arith.constant 0 : index
    %31 = vector.load %arg3[%c0_15, %c0_16] : memref<64x128xf32, #tpu.memory_space<vmem>>, vector<64x128xf32>
    tpu.vector_store %arg3[%c0_15, %c0_16], %30 {strides = array<i32>} : memref<64x128xf32, #tpu.memory_space<vmem>>, vector<64x128xf32>,
    return
  }
}

</mosaic_0001>

<llo_original>
// kernel: tpu_custom_call.1
$region0: #{tpu_custom_call.1}
  #allocation0 [shape = 'u32[]', space=smem, size = 0x4, offset = 0x4, fixed_abs, tag = 'smem constant byte address 0x4 - core index']
  #allocation1 [shape = 'u32[144,128]{1,0:T(1,128)}', space=vmem, size = 0x12000, scoped, tag = 'internal scratch']
  %s0 = inlined_call_operand.vmem [shape: f32[64,32], index: 0, kind: input, shape index: {}]
  %s1 = inlined_call_operand.vmem [shape: f32[64,8], index: 1, kind: input, shape index: {}]
  %s2 = inlined_call_operand.hbm [shape: f32[176,128], index: 2, kind: input, shape index: {}]
  %s3 = inlined_call_operand.hbm [shape: f32[64,128], index: 3, kind: output, shape index: {}]
  %s4 = sld [smem:[#allocation0]]
  $region26: #{tpu_custom_call.1} parent=0
    _
  %s6 = ssub.s32 1, %s4
  %s7 = scalar_select 0, %s6, %s4
  $region1: #{tpu_custom_call.1} parent=0
    #allocation2 [shape = 'u8[90112]{0}', space=vmem, size = 0x16000, scoped, tag = 'input window, operand 2, single buffered']
    #allocation3 [shape = 's32[1]{0}', space=sflag, size = 0x4, scoped, tag = 'scoped memory for tpu_custom_call.1']
    #allocation4 [shape = 's32[1]{0}', space=sflag, size = 0x4, scoped, tag = 'scoped memory for tpu_custom_call.1']
    #allocation5 [shape = 'u8[32768]{0}', space=vmem, size = 0x8000, scoped, tag = 'output window, operand 0, single buffered']
    %8 = vsyncpa [#allocation3], 0
    %9 = vsyncpa [#allocation4], 0
    // Predicated region
    $region2: #{tpu_custom_call.1} parent=1 // pred_check
      _
    $region3: #{tpu_custom_call.1} parent=1 // pred_check_branch
      %11 = sbr.rel (0) target = $region5
    $region4: #{tpu_custom_call.1} parent=1 // pred_region
      _
    $region5: #{tpu_custom_call.1} parent=1 // pred_fallthru
      _
    // Predicated region
    $region6: #{tpu_custom_call.1} parent=1 // pred_check
      _
    $region7: #{tpu_custom_call.1} parent=1 // pred_check_branch
      %13 = sbr.rel (0) target = $region9
    $region8: #{tpu_custom_call.1} parent=1 // pred_region
      _
    $region9: #{tpu_custom_call.1} parent=1 // pred_fallthru
      _
    // Predicated region
    $region10: #{tpu_custom_call.1} parent=1 // pred_check
      _
    $region11: #{tpu_custom_call.1} parent=1 // pred_check_branch
      %15 = sbr.rel (0) target = $region13
    $region12: #{tpu_custom_call.1} parent=1 // pred_region
      %s17 = ssub.s32 2816, 2816
      %18 = vsyncadd [#allocation3], %s17
      %s19 = sshll.u32 [#allocation2], 4
      %s20 = int_to_ptr.vmem [resolvable:$true] %s19
      %25 = dma.hbm_to_vmem [thread:$0]  %s2, 2816, %s20, [#allocation3], 128, 128, 8
    $region13: #{tpu_custom_call.1} parent=1 // pred_fallthru
      _
    // Predicated region
    $region14: #{tpu_custom_call.1} parent=1 // pred_check
      _
    $region15: #{tpu_custom_call.1} parent=1 // pred_check_branch
      %27 = sbr.rel (0) target = $region17
    $region16: #{tpu_custom_call.1} parent=1 // pred_region
      %28 = dma.done [#allocation3], 2816
    $region17: #{tpu_custom_call.1} parent=1 // pred_fallthru
      _
    %v29 = vld [vmem:[%s0] sm:$0xff]
    %v30 = vld [vmem:[%s0 + $0x8] sm:$0xff]
    %v31 = vld [vmem:[%s0 + $0x10] sm:$0xff]
    %v32 = vld [vmem:[%s0 + $0x18] sm:$0xff]
    %v33 = vld [vmem:[%s0 + $0x20] sm:$0xff]
    %v34 = vld [vmem:[%s0 + $0x28] sm:$0xff]
    %v35 = vld [vmem:[%s0 + $0x30] sm:$0xff]
    %v36 = vld [vmem:[%s0 + $0x38] sm:$0xff]
    %v37 = vld [vmem:[%s1] sm:$0xff]
    %v38 = vld [vmem:[%s1 + $0x8] sm:$0xff]
    %v39 = vld [vmem:[%s1 + $0x10] sm:$0xff]
    %v40 = vld [vmem:[%s1 + $0x18] sm:$0xff]
    %v41 = vld [vmem:[%s1 + $0x20] sm:$0xff]
    %v42 = vld [vmem:[%s1 + $0x28] sm:$0xff]
    %v43 = vld [vmem:[%s1 + $0x30] sm:$0xff]
    %v44 = vld [vmem:[%s1 + $0x38] sm:$0xff]
    %v45 = vld [vmem:[#allocation2] sm:$0xff]
    %v46 = vld [vmem:[#allocation2 + $0x8] sm:$0xff]
    %v47 = vld [vmem:[#allocation2 + $0x10] sm:$0xff]
    %v48 = vld [vmem:[#allocation2 + $0x18] sm:$0xff]
    %v49 = vld [vmem:[#allocation2 + $0x20] sm:$0xff]
    %v50 = vld [vmem:[#allocation2 + $0x28] sm:$0xff]
    %v51 = vld [vmem:[#allocation2 + $0x30] sm:$0xff]
    %v52 = vld [vmem:[#allocation2 + $0x38] sm:$0xff]
    %v53 = vld [vmem:[#allocation2 + $0x40] sm:$0xff]
    %v54 = vld [vmem:[#allocation2 + $0x48] sm:$0xff]
    %v55 = vld [vmem:[#allocation2 + $0x50] sm:$0xff]
    %v56 = vld [vmem:[#allocation2 + $0x58] sm:$0xff]
    %v57 = vld [vmem:[#allocation2 + $0x60] sm:$0xff]
    %v58 = vld [vmem:[#allocation2 + $0xa8] sm:$0xff]
    %v59 = vlaneseq
    %v60 = vshrl.u32 %v59, 7
    %v61 = vsub.s32 0, %v60
    %v62 = vrot.slane %v58, %v61
    %vm63 = vcmask 64512
    %v65 = vsel %vm63, %v37, 0
    %v68 = vsel %vm63, %v38, 0
    %v71 = vsel %vm63, %v39, 0
    %v74 = vsel %vm63, %v40, 0
    %v77 = vsel %vm63, %v41, 0
    %v80 = vsel %vm63, %v42, 0
    %v83 = vsel %vm63, %v43, 0
    %v86 = vsel %vm63, %v44, 0
    %88 = vmatprep.subr.mxu0 0.0
    %89 = vmatpush1.msra.mxu0 %v45
    %90 = vmatprep.subr.mxu0 0.0
    %91 = vmatpush1.msra.mxu0 0.0
    %92 = vmatprep.subr.mxu0 0.0
    %93 = vmatpush1.msra.mxu0 0.0
    %94 = vmatprep.subr.mxu0 0.0
    %95 = vmatpush1.msra.mxu0 0.0
    %96 = vmatprep.subr.mxu0 0.0
    %97 = vmatpush1.msra.mxu0 0.0
    %98 = vmatprep.subr.mxu0 0.0
    %99 = vmatpush1.msra.mxu0 0.0
    %100 = vmatprep.subr.mxu0 0.0
    %101 = vmatpush1.msra.mxu0 0.0
    %102 = vmatprep.subr.mxu0 0.0
    %103 = vmatpush1.msra.mxu0 0.0
    %104 = vmatprep.subr.mxu0 0.0
    %105 = vmatpush1.msra.mxu0 0.0
    %106 = vmatprep.subr.mxu0 0.0
    %107 = vmatpush1.msra.mxu0 0.0
    %108 = vmatprep.subr.mxu0 0.0
    %109 = vmatpush1.msra.mxu0 0.0
    %110 = vmatprep.subr.mxu0 0.0
    %111 = vmatpush1.msra.mxu0 0.0
    %112 = vmatprep.subr.mxu0 0.0
    %113 = vmatpush1.msra.mxu0 0.0
    %114 = vmatprep.subr.mxu0 0.0
    %115 = vmatpush1.msra.mxu0 0.0
    %116 = vmatprep.subr.mxu0 0.0
    %117 = vmatpush1.msra.mxu0 0.0
    %118 = vmatprep.subr.mxu0 0.0
    %119 = vmatpush1.msra.mxu0 0.0
    %120 = vmatprep.subr.mxu0 0.0
    %121 = vmatpush1.msra.mxu0 0.0
    %122 = vmatprep.subr.mxu0 0.0
    %123 = vmatpush1.msra.mxu0 0.0
    %124 = vmatprep.subr.mxu0 0.0
    %125 = vmatpush1.msra.mxu0 0.0
    %126 = vmatprep.subr.mxu0 0.0
    %127 = vmatpush1.msra.mxu0 0.0
    %128 = vmatprep.subr.mxu0 0.0
    %129 = vmatpush1.msra.mxu0 0.0
    %130 = vmatprep.subr.mxu0 0.0
    %131 = vmatpush1.msra.mxu0 0.0
    %132 = vmatprep.subr.mxu0 0.0
    %133 = vmatpush1.msra.mxu0 0.0
    %134 = vmatprep.subr.mxu0 0.0
    %135 = vmatpush1.msra.mxu0 0.0
    %136 = vmatprep.subr.mxu0 0.0
    %137 = vmatpush1.msra.mxu0 0.0
    %138 = vmatprep.subr.mxu0 0.0
    %139 = vmatpush1.msra.mxu0 0.0
    %140 = vmatprep.subr.mxu0 0.0
    %141 = vmatpush1.msra.mxu0 0.0
    %142 = vmatprep.subr.mxu0 0.0
    %143 = vmatpush1.msra.mxu0 0.0
    %144 = vmatprep.subr.mxu0 0.0
    %145 = vmatpush1.msra.mxu0 0.0
    %146 = vmatprep.subr.mxu0 0.0
    %147 = vmatpush1.msra.mxu0 0.0
    %148 = vmatprep.subr.mxu0 0.0
    %149 = vmatpush1.msra.mxu0 0.0
    %150 = vmatprep.subr.mxu0 0.0
    %151 = vmatpush1.msra.mxu0 0.0
    %152 = vmatprep.mubr.f32.mxu0 0.0
    %153 = vmatmul.mubr.f32.gmra.mrb[0].mxu0 %v65
    %v154 = vpop.f32.mrb[0].mxu0
    %v155 = vadd.f32 %v62, %v154
    %v156 = vpop.f32.mrb[0].mxu0
    %157 = vmatprep.mubr.f32.mxu0 0.0
    %158 = vmatmul.mubr.f32.gmra.mrb[0].mxu0 %v68
    %v159 = vpop.f32.mrb[0].mxu0
    %v160 = vadd.f32 %v62, %v159
    %v161 = vpop.f32.mrb[0].mxu0
    %162 = vmatprep.mubr.f32.mxu0 0.0
    %163 = vmatmul.mubr.f32.gmra.mrb[0].mxu0 %v71
    %v164 = vpop.f32.mrb[0].mxu0
    %v165 = vadd.f32 %v62, %v164
    %v166 = vpop.f32.mrb[0].mxu0
    %167 = vmatprep.mubr.f32.mxu0 0.0
    %168 = vmatmul.mubr.f32.gmra.mrb[0].mxu0 %v74
    %v169 = vpop.f32.mrb[0].mxu0
    %v170 = vadd.f32 %v62, %v169
    %v171 = vpop.f32.mrb[0].mxu0
    %172 = vmatprep.mubr.f32.mxu0 0.0
    %173 = vmatmul.mubr.f32.gmra.mrb[0].mxu0 %v77
    %v174 = vpop.f32.mrb[0].mxu0
    %v175 = vadd.f32 %v62, %v174
    %v176 = vpop.f32.mrb[0].mxu0
    %177 = vmatprep.mubr.f32.mxu0 0.0
    %178 = vmatmul.mubr.f32.gmra.mrb[0].mxu0 %v80
    %v179 = vpop.f32.mrb[0].mxu0
    %v180 = vadd.f32 %v62, %v179
    %v181 = vpop.f32.mrb[0].mxu0
    %182 = vmatprep.mubr.f32.mxu0 0.0
    %183 = vmatmul.mubr.f32.gmra.mrb[0].mxu0 %v83
    %v184 = vpop.f32.mrb[0].mxu0
    %v185 = vadd.f32 %v62, %v184
    %v186 = vpop.f32.mrb[0].mxu0
    %187 = vmatprep.mubr.f32.mxu0 0.0
    %188 = vmatmul.mubr.f32.gmra.mrb[0].mxu0 %v86
    %v189 = vpop.f32.mrb[0].mxu0
    %v190 = vadd.f32 %v62, %v189
    %v191 = vpop.f32.mrb[0].mxu0
    %192 = vdwg.mxu0
    %v193 = vmax.f32 %v155, 0.0
    %v194 = vmax.f32 %v160, 0.0
    %v195 = vmax.f32 %v165, 0.0
    %v196 = vmax.f32 %v170, 0.0
    %v197 = vmax.f32 %v175, 0.0
    %v198 = vmax.f32 %v180, 0.0
    %v199 = vmax.f32 %v185, 0.0
    %v200 = vmax.f32 %v190, 0.0
    %v201 = vlaneseq
    %v202 = vshrl.u32 %v201, 7
    %v203 = vsub.s32 1, %v202
    %v204 = vrot.slane %v58, %v203
    %vm205 = vcmask 130048
    %v207 = vsel %vm205, %v193, 0
    %v210 = vsel %vm205, %v194, 0
    %v213 = vsel %vm205, %v195, 0
    %v216 = vsel %vm205, %v196, 0
    %v219 = vsel %vm205, %v197, 0
    %v222 = vsel %vm205, %v198, 0
    %v225 = vsel %vm205, %v199, 0
    %v228 = vsel %vm205, %v200, 0
    %230 = vmatprep.subr.mxu0 0.0
    %231 = vmatpush1.msra.mxu0 %v46
    %232 = vmatprep.subr.mxu0 0.0
    %233 = vmatpush1.msra.mxu0 %v47
    %234 = vmatprep.subr.mxu0 0.0
    %235 = vmatpush1.msra.mxu0 0.0
    %236 = vmatprep.subr.mxu0 0.0
    %237 = vmatpush1.msra.mxu0 0.0
    %238 = vmatprep.subr.mxu0 0.0
    %239 = vmatpush1.msra.mxu0 0.0
    %240 = vmatprep.subr.mxu0 0.0
    %241 = vmatpush1.msra.mxu0 0.0
    %242 = vmatprep.subr.mxu0 0.0
    %243 = vmatpush1.msra.mxu0 0.0
    %244 = vmatprep.subr.mxu0 0.0
    %245 = vmatpush1.msra.mxu0 0.0
    %246 = vmatprep.subr.mxu0 0.0
    %247 = vmatpush1.msra.mxu0 0.0
    %248 = vmatprep.subr.mxu0 0.0
    %249 = vmatpush1.msra.mxu0 0.0
    %250 = vmatprep.subr.mxu0 0.0
    %251 = vmatpush1.msra.mxu0 0.0
    %252 = vmatprep.subr.mxu0 0.0
    %253 = vmatpush1.msra.mxu0 0.0
    %254 = vmatprep.subr.mxu0 0.0
    %255 = vmatpush1.msra.mxu0 0.0
    %256 = vmatprep.subr.mxu0 0.0
    %257 = vmatpush1.msra.mxu0 0.0
    %258 = vmatprep.subr.mxu0 0.0
    %259 = vmatpush1.msra.mxu0 0.0
    %260 = vmatprep.subr.mxu0 0.0
    %261 = vmatpush1.msra.mxu0 0.0
    %262 = vmatprep.subr.mxu0 0.0
    %263 = vmatpush1.msra.mxu0 0.0
    %264 = vmatprep.subr.mxu0 0.0
    %265 = vmatpush1.msra.mxu0 0.0
    %266 = vmatprep.subr.mxu0 0.0
    %267 = vmatpush1.msra.mxu0 0.0
    %268 = vmatprep.subr.mxu0 0.0
    %269 = vmatpush1.msra.mxu0 0.0
    %270 = vmatprep.subr.mxu0 0.0
    %271 = vmatpush1.msra.mxu0 0.0
    %272 = vmatprep.subr.mxu0 0.0
    %273 = vmatpush1.msra.mxu0 0.0
    %274 = vmatprep.subr.mxu0 0.0
    %275 = vmatpush1.msra.mxu0 0.0
    %276 = vmatprep.subr.mxu0 0.0
    %277 = vmatpush1.msra.mxu0 0.0
    %278 = vmatprep.subr.mxu0 0.0
    %279 = vmatpush1.msra.mxu0 0.0
    %280 = vmatprep.subr.mxu0 0.0
    %281 = vmatpush1.msra.mxu0 0.0
    %282 = vmatprep.subr.mxu0 0.0
    %283 = vmatpush1.msra.mxu0 0.0
    %284 = vmatprep.subr.mxu0 0.0
    %285 = vmatpush1.msra.mxu0 0.0
    %286 = vmatprep.subr.mxu0 0.0
    %287 = vmatpush1.msra.mxu0 0.0
    %288 = vmatprep.subr.mxu0 0.0
    %289 = vmatpush1.msra.mxu0 0.0
    %290 = vmatprep.subr.mxu0 0.0
    %291 = vmatpush1.msra.mxu0 0.0
    %292 = vmatprep.subr.mxu0 0.0
    %293 = vmatpush1.msra.mxu0 0.0
    %294 = vmatprep.mubr.f32.mxu0 0.0
    %295 = vmatmul.mubr.f32.gmra.mrb[0].mxu0 %v207
    %v296 = vpop.f32.mrb[0].mxu0
    %v297 = vadd.f32 %v204, %v296
    %v298 = vpop.f32.mrb[0].mxu0
    %299 = vmatprep.mubr.f32.mxu0 0.0
    %300 = vmatmul.mubr.f32.gmra.mrb[0].mxu0 %v210
    %v301 = vpop.f32.mrb[0].mxu0
    %v302 = vadd.f32 %v204, %v301
    %v303 = vpop.f32.mrb[0].mxu0
    %304 = vmatprep.mubr.f32.mxu0 0.0
    %305 = vmatmul.mubr.f32.gmra.mrb[0].mxu0 %v213
    %v306 = vpop.f32.mrb[0].mxu0
    %v307 = vadd.f32 %v204, %v306
    %v308 = vpop.f32.mrb[0].mxu0
    %309 = vmatprep.mubr.f32.mxu0 0.0
    %310 = vmatmul.mubr.f32.gmra.mrb[0].mxu0 %v216
    %v311 = vpop.f32.mrb[0].mxu0
    %v312 = vadd.f32 %v204, %v311
    %v313 = vpop.f32.mrb[0].mxu0
    %314 = vmatprep.mubr.f32.mxu0 0.0
    %315 = vmatmul.mubr.f32.gmra.mrb[0].mxu0 %v219
    %v316 = vpop.f32.mrb[0].mxu0
    %v317 = vadd.f32 %v204, %v316
    %v318 = vpop.f32.mrb[0].mxu0
    %319 = vmatprep.mubr.f32.mxu0 0.0
    %320 = vmatmul.mubr.f32.gmra.mrb[0].mxu0 %v222
    %v321 = vpop.f32.mrb[0].mxu0
    %v322 = vadd.f32 %v204, %v321
    %v323 = vpop.f32.mrb[0].mxu0
    %324 = vmatprep.mubr.f32.mxu0 0.0
    %325 = vmatmul.mubr.f32.gmra.mrb[0].mxu0 %v225
    %v326 = vpop.f32.mrb[0].mxu0
    %v327 = vadd.f32 %v204, %v326
    %v328 = vpop.f32.mrb[0].mxu0
    %329 = vmatprep.mubr.f32.mxu0 0.0
    %330 = vmatmul.mubr.f32.gmra.mrb[0].mxu0 %v228
    %v331 = vpop.f32.mrb[0].mxu0
    %v332 = vadd.f32 %v204, %v331
    %v333 = vpop.f32.mrb[0].mxu0
    %334 = vdwg.mxu0
    %v336 = vsel %vm205, %v297, 0
    %v339 = vsel %vm205, %v302, 0
    %v342 = vsel %vm205, %v307, 0
    %v345 = vsel %vm205, %v312, 0
    %v348 = vsel %vm205, %v317, 0
    %v351 = vsel %vm205, %v322, 0
    %v354 = vsel %vm205, %v327, 0
    %v357 = vsel %vm205, %v332, 0
    %359 = vmatprep.subr.mxu0 0.0
    %360 = vmatpush1.msra.mxu0 %v52
    %361 = vmatprep.subr.mxu0 0.0
    %362 = vmatpush1.msra.mxu0 %v53
    %363 = vmatprep.subr.mxu0 0.0
    %364 = vmatpush1.msra.mxu0 0.0
    %365 = vmatprep.subr.mxu0 0.0
    %366 = vmatpush1.msra.mxu0 0.0
    %367 = vmatprep.subr.mxu0 0.0
    %368 = vmatpush1.msra.mxu0 0.0
    %369 = vmatprep.subr.mxu0 0.0
    %370 = vmatpush1.msra.mxu0 0.0
    %371 = vmatprep.subr.mxu0 0.0
    %372 = vmatpush1.msra.mxu0 0.0
    %373 = vmatprep.subr.mxu0 0.0
    %374 = vmatpush1.msra.mxu0 0.0
    %375 = vmatprep.subr.mxu0 0.0
    %376 = vmatpush1.msra.mxu0 0.0
    %377 = vmatprep.subr.mxu0 0.0
    %378 = vmatpush1.msra.mxu0 0.0
    %379 = vmatprep.subr.mxu0 0.0
    %380 = vmatpush1.msra.mxu0 0.0
    %381 = vmatprep.subr.mxu0 0.0
    %382 = vmatpush1.msra.mxu0 0.0
    %383 = vmatprep.subr.mxu0 0.0
    %384 = vmatpush1.msra.mxu0 0.0
    %385 = vmatprep.subr.mxu0 0.0
    %386 = vmatpush1.msra.mxu0 0.0
    %387 = vmatprep.subr.mxu0 0.0
    %388 = vmatpush1.msra.mxu0 0.0
    %389 = vmatprep.subr.mxu0 0.0
    %390 = vmatpush1.msra.mxu0 0.0
    %391 = vmatprep.subr.mxu0 0.0
    %392 = vmatpush1.msra.mxu0 0.0
    %393 = vmatprep.subr.mxu0 0.0
    %394 = vmatpush1.msra.mxu0 0.0
    %395 = vmatprep.subr.mxu0 0.0
    %396 = vmatpush1.msra.mxu0 0.0
    %397 = vmatprep.subr.mxu0 0.0
    %398 = vmatpush1.msra.mxu0 0.0
    %399 = vmatprep.subr.mxu0 0.0
    %400 = vmatpush1.msra.mxu0 0.0
    %401 = vmatprep.subr.mxu0 0.0
    %402 = vmatpush1.msra.mxu0 0.0
    %403 = vmatprep.subr.mxu0 0.0
    %404 = vmatpush1.msra.mxu0 0.0
    %405 = vmatprep.subr.mxu0 0.0
    %406 = vmatpush1.msra.mxu0 0.0
    %407 = vmatprep.subr.mxu0 0.0
    %408 = vmatpush1.msra.mxu0 0.0
    %409 = vmatprep.subr.mxu0 0.0
    %410 = vmatpush1.msra.mxu0 0.0
    %411 = vmatprep.subr.mxu0 0.0
    %412 = vmatpush1.msra.mxu0 0.0
    %413 = vmatprep.subr.mxu0 0.0
    %414 = vmatpush1.msra.mxu0 0.0
    %415 = vmatprep.subr.mxu0 0.0
    %416 = vmatpush1.msra.mxu0 0.0
    %417 = vmatprep.subr.mxu0 0.0
    %418 = vmatpush1.msra.mxu0 0.0
    %419 = vmatprep.subr.mxu0 0.0
    %420 = vmatpush1.msra.mxu0 0.0
    %421 = vmatprep.subr.mxu0 0.0
    %422 = vmatpush1.msra.mxu0 0.0
    %423 = vmatprep.mubr.f32.mxu0 0.0
    %424 = vmatmul.mubr.f32.gmra.mrb[0].mxu0 %v336
    %v425 = vpop.f32.mrb[0].mxu0
    %v426 = vadd.f32 0.0, %v425
    %v427 = vpop.f32.mrb[0].mxu0
    %428 = vmatprep.mubr.f32.mxu0 0.0
    %429 = vmatmul.mubr.f32.gmra.mrb[0].mxu0 %v339
    %v430 = vpop.f32.mrb[0].mxu0
    %v431 = vadd.f32 0.0, %v430
    %v432 = vpop.f32.mrb[0].mxu0
    %433 = vmatprep.mubr.f32.mxu0 0.0
    %434 = vmatmul.mubr.f32.gmra.mrb[0].mxu0 %v342
    %v435 = vpop.f32.mrb[0].mxu0
    %v436 = vadd.f32 0.0, %v435
    %v437 = vpop.f32.mrb[0].mxu0
    %438 = vmatprep.mubr.f32.mxu0 0.0
    %439 = vmatmul.mubr.f32.gmra.mrb[0].mxu0 %v345
    %v440 = vpop.f32.mrb[0].mxu0
    %v441 = vadd.f32 0.0, %v440
    %v442 = vpop.f32.mrb[0].mxu0
    %443 = vmatprep.mubr.f32.mxu0 0.0
    %444 = vmatmul.mubr.f32.gmra.mrb[0].mxu0 %v348
    %v445 = vpop.f32.mrb[0].mxu0
    %v446 = vadd.f32 0.0, %v445
    %v447 = vpop.f32.mrb[0].mxu0
    %448 = vmatprep.mubr.f32.mxu0 0.0
    %449 = vmatmul.mubr.f32.gmra.mrb[0].mxu0 %v351
    %v450 = vpop.f32.mrb[0].mxu0
    %v451 = vadd.f32 0.0, %v450
    %v452 = vpop.f32.mrb[0].mxu0
    %453 = vmatprep.mubr.f32.mxu0 0.0
    %454 = vmatmul.mubr.f32.gmra.mrb[0].mxu0 %v354
    %v455 = vpop.f32.mrb[0].mxu0
    %v456 = vadd.f32 0.0, %v455
    %v457 = vpop.f32.mrb[0].mxu0
    %458 = vmatprep.mubr.f32.mxu0 0.0
    %459 = vmatmul.mubr.f32.gmra.mrb[0].mxu0 %v357
    %v460 = vpop.f32.mrb[0].mxu0
    %v461 = vadd.f32 0.0, %v460
    %v462 = vpop.f32.mrb[0].mxu0
    %463 = vdwg.mxu0
    %vm464 = vcmask 261120
    %v466 = vsel %vm464, %v29, 0
    %v469 = vsel %vm464, %v30, 0
    %v472 = vsel %vm464, %v31, 0
    %v475 = vsel %vm464, %v32, 0
    %v478 = vsel %vm464, %v33, 0
    %v481 = vsel %vm464, %v34, 0
    %v484 = vsel %vm464, %v35, 0
    %v487 = vsel %vm464, %v36, 0
    %489 = vmatprep.subr.mxu0 0.0
    %490 = vmatpush1.msra.mxu0 %v48
    %491 = vmatprep.subr.mxu0 0.0
    %492 = vmatpush1.msra.mxu0 %v49
    %493 = vmatprep.subr.mxu0 0.0
    %494 = vmatpush1.msra.mxu0 %v50
    %495 = vmatprep.subr.mxu0 0.0
    %496 = vmatpush1.msra.mxu0 %v51
    %497 = vmatprep.subr.mxu0 0.0
    %498 = vmatpush1.msra.mxu0 0.0
    %499 = vmatprep.subr.mxu0 0.0
    %500 = vmatpush1.msra.mxu0 0.0
    %501 = vmatprep.subr.mxu0 0.0
    %502 = vmatpush1.msra.mxu0 0.0
    %503 = vmatprep.subr.mxu0 0.0
    %504 = vmatpush1.msra.mxu0 0.0
    %505 = vmatprep.subr.mxu0 0.0
    %506 = vmatpush1.msra.mxu0 0.0
    %507 = vmatprep.subr.mxu0 0.0
    %508 = vmatpush1.msra.mxu0 0.0
    %509 = vmatprep.subr.mxu0 0.0
    %510 = vmatpush1.msra.mxu0 0.0
    %511 = vmatprep.subr.mxu0 0.0
    %512 = vmatpush1.msra.mxu0 0.0
    %513 = vmatprep.subr.mxu0 0.0
    %514 = vmatpush1.msra.mxu0 0.0
    %515 = vmatprep.subr.mxu0 0.0
    %516 = vmatpush1.msra.mxu0 0.0
    %517 = vmatprep.subr.mxu0 0.0
    %518 = vmatpush1.msra.mxu0 0.0
    %519 = vmatprep.subr.mxu0 0.0
    %520 = vmatpush1.msra.mxu0 0.0
    %521 = vmatprep.subr.mxu0 0.0
    %522 = vmatpush1.msra.mxu0 0.0
    %523 = vmatprep.subr.mxu0 0.0
    %524 = vmatpush1.msra.mxu0 0.0
    %525 = vmatprep.subr.mxu0 0.0
    %526 = vmatpush1.msra.mxu0 0.0
    %527 = vmatprep.subr.mxu0 0.0
    %528 = vmatpush1.msra.mxu0 0.0
    %529 = vmatprep.subr.mxu0 0.0
    %530 = vmatpush1.msra.mxu0 0.0
    %531 = vmatprep.subr.mxu0 0.0
    %532 = vmatpush1.msra.mxu0 0.0
    %533 = vmatprep.subr.mxu0 0.0
    %534 = vmatpush1.msra.mxu0 0.0
    %535 = vmatprep.subr.mxu0 0.0
    %536 = vmatpush1.msra.mxu0 0.0
    %537 = vmatprep.subr.mxu0 0.0
    %538 = vmatpush1.msra.mxu0 0.0
    %539 = vmatprep.subr.mxu0 0.0
    %540 = vmatpush1.msra.mxu0 0.0
    %541 = vmatprep.subr.mxu0 0.0
    %542 = vmatpush1.msra.mxu0 0.0
    %543 = vmatprep.subr.mxu0 0.0
    %544 = vmatpush1.msra.mxu0 0.0
    %545 = vmatprep.subr.mxu0 0.0
    %546 = vmatpush1.msra.mxu0 0.0
    %547 = vmatprep.subr.mxu0 0.0
    %548 = vmatpush1.msra.mxu0 0.0
    %549 = vmatprep.subr.mxu0 0.0
    %550 = vmatpush1.msra.mxu0 0.0
    %551 = vmatprep.subr.mxu0 0.0
    %552 = vmatpush1.msra.mxu0 0.0
    %553 = vmatprep.mubr.f32.mxu0 0.0
    %554 = vmatmul.mubr.f32.gmra.mrb[0].mxu0 %v466
    %v555 = vpop.f32.mrb[0].mxu0
    %v556 = vadd.f32 %v426, %v555
    %v557 = vpop.f32.mrb[0].mxu0
    %558 = vmatprep.mubr.f32.mxu0 0.0
    %559 = vmatmul.mubr.f32.gmra.mrb[0].mxu0 %v469
    %v560 = vpop.f32.mrb[0].mxu0
    %v561 = vadd.f32 %v431, %v560
    %v562 = vpop.f32.mrb[0].mxu0
    %563 = vmatprep.mubr.f32.mxu0 0.0
    %564 = vmatmul.mubr.f32.gmra.mrb[0].mxu0 %v472
    %v565 = vpop.f32.mrb[0].mxu0
    %v566 = vadd.f32 %v436, %v565
    %v567 = vpop.f32.mrb[0].mxu0
    %568 = vmatprep.mubr.f32.mxu0 0.0
    %569 = vmatmul.mubr.f32.gmra.mrb[0].mxu0 %v475
    %v570 = vpop.f32.mrb[0].mxu0
    %v571 = vadd.f32 %v441, %v570
    %v572 = vpop.f32.mrb[0].mxu0
    %573 = vmatprep.mubr.f32.mxu0 0.0
    %574 = vmatmul.mubr.f32.gmra.mrb[0].mxu0 %v478
    %v575 = vpop.f32.mrb[0].mxu0
    %v576 = vadd.f32 %v446, %v575
    %v577 = vpop.f32.mrb[0].mxu0
    %578 = vmatprep.mubr.f32.mxu0 0.0
    %579 = vmatmul.mubr.f32.gmra.mrb[0].mxu0 %v481
    %v580 = vpop.f32.mrb[0].mxu0
    %v581 = vadd.f32 %v451, %v580
    %v582 = vpop.f32.mrb[0].mxu0
    %583 = vmatprep.mubr.f32.mxu0 0.0
    %584 = vmatmul.mubr.f32.gmra.mrb[0].mxu0 %v484
    %v585 = vpop.f32.mrb[0].mxu0
    %v586 = vadd.f32 %v456, %v585
    %v587 = vpop.f32.mrb[0].mxu0
    %588 = vmatprep.mubr.f32.mxu0 0.0
    %589 = vmatmul.mubr.f32.gmra.mrb[0].mxu0 %v487
    %v590 = vpop.f32.mrb[0].mxu0
    %v591 = vadd.f32 %v461, %v590
    %v592 = vpop.f32.mrb[0].mxu0
    %593 = vdwg.mxu0
    %v594 = vlaneseq
    %v595 = vshrl.u32 %v594, 7
    %v596 = vsub.s32 2, %v595
    %v597 = vrot.slane %v58, %v596
    %v598 = vadd.f32 %v556, %v597
    %v599 = vadd.f32 %v561, %v597
    %v600 = vadd.f32 %v566, %v597
    %v601 = vadd.f32 %v571, %v597
    %v602 = vadd.f32 %v576, %v597
    %v603 = vadd.f32 %v581, %v597
    %v604 = vadd.f32 %v586, %v597
    %v605 = vadd.f32 %v591, %v597
    %v606 = vmax.f32 %v598, 0.0
    %v607 = vmax.f32 %v599, 0.0
    %v608 = vmax.f32 %v600, 0.0
    %v609 = vmax.f32 %v601, 0.0
    %v610 = vmax.f32 %v602, 0.0
    %v611 = vmax.f32 %v603, 0.0
    %v612 = vmax.f32 %v604, 0.0
    %v613 = vmax.f32 %v605, 0.0
    %v614 = vlaneseq
    %v615 = vshrl.u32 %v614, 7
    %v616 = vsub.s32 3, %v615
    %v617 = vrot.slane %v58, %v616
    %v619 = vsel %vm464, %v606, 0
    %v622 = vsel %vm464, %v607, 0
    %v625 = vsel %vm464, %v608, 0
    %v628 = vsel %vm464, %v609, 0
    %v631 = vsel %vm464, %v610, 0
    %v634 = vsel %vm464, %v611, 0
    %v637 = vsel %vm464, %v612, 0
    %v640 = vsel %vm464, %v613, 0
    %642 = vmatprep.subr.mxu0 0.0
    %643 = vmatpush1.msra.mxu0 %v54
    %644 = vmatprep.subr.mxu0 0.0
    %645 = vmatpush1.msra.mxu0 %v55
    %646 = vmatprep.subr.mxu0 0.0
    %647 = vmatpush1.msra.mxu0 %v56
    %648 = vmatprep.subr.mxu0 0.0
    %649 = vmatpush1.msra.mxu0 %v57
    %650 = vmatprep.subr.mxu0 0.0
    %651 = vmatpush1.msra.mxu0 0.0
    %652 = vmatprep.subr.mxu0 0.0
    %653 = vmatpush1.msra.mxu0 0.0
    %654 = vmatprep.subr.mxu0 0.0
    %655 = vmatpush1.msra.mxu0 0.0
    %656 = vmatprep.subr.mxu0 0.0
    %657 = vmatpush1.msra.mxu0 0.0
    %658 = vmatprep.subr.mxu0 0.0
    %659 = vmatpush1.msra.mxu0 0.0
    %660 = vmatprep.subr.mxu0 0.0
    %661 = vmatpush1.msra.mxu0 0.0
    %662 = vmatprep.subr.mxu0 0.0
    %663 = vmatpush1.msra.mxu0 0.0
    %664 = vmatprep.subr.mxu0 0.0
    %665 = vmatpush1.msra.mxu0 0.0
    %666 = vmatprep.subr.mxu0 0.0
    %667 = vmatpush1.msra.mxu0 0.0
    %668 = vmatprep.subr.mxu0 0.0
    %669 = vmatpush1.msra.mxu0 0.0
    %670 = vmatprep.subr.mxu0 0.0
    %671 = vmatpush1.msra.mxu0 0.0
    %672 = vmatprep.subr.mxu0 0.0
    %673 = vmatpush1.msra.mxu0 0.0
    %674 = vmatprep.subr.mxu0 0.0
    %675 = vmatpush1.msra.mxu0 0.0
    %676 = vmatprep.subr.mxu0 0.0
    %677 = vmatpush1.msra.mxu0 0.0
    %678 = vmatprep.subr.mxu0 0.0
    %679 = vmatpush1.msra.mxu0 0.0
    %680 = vmatprep.subr.mxu0 0.0
    %681 = vmatpush1.msra.mxu0 0.0
    %682 = vmatprep.subr.mxu0 0.0
    %683 = vmatpush1.msra.mxu0 0.0
    %684 = vmatprep.subr.mxu0 0.0
    %685 = vmatpush1.msra.mxu0 0.0
    %686 = vmatprep.subr.mxu0 0.0
    %687 = vmatpush1.msra.mxu0 0.0
    %688 = vmatprep.subr.mxu0 0.0
    %689 = vmatpush1.msra.mxu0 0.0
    %690 = vmatprep.subr.mxu0 0.0
    %691 = vmatpush1.msra.mxu0 0.0
    %692 = vmatprep.subr.mxu0 0.0
    %693 = vmatpush1.msra.mxu0 0.0
    %694 = vmatprep.subr.mxu0 0.0
    %695 = vmatpush1.msra.mxu0 0.0
    %696 = vmatprep.subr.mxu0 0.0
    %697 = vmatpush1.msra.mxu0 0.0
    %698 = vmatprep.subr.mxu0 0.0
    %699 = vmatpush1.msra.mxu0 0.0
    %700 = vmatprep.subr.mxu0 0.0
    %701 = vmatpush1.msra.mxu0 0.0
    %702 = vmatprep.subr.mxu0 0.0
    %703 = vmatpush1.msra.mxu0 0.0
    %704 = vmatprep.subr.mxu0 0.0
    %705 = vmatpush1.msra.mxu0 0.0
    %706 = vmatprep.mubr.f32.mxu0 0.0
    %707 = vmatmul.mubr.f32.gmra.mrb[0].mxu0 %v619
    %v708 = vpop.f32.mrb[0].mxu0
    %v709 = vadd.f32 %v617, %v708
    %v710 = vpop.f32.mrb[0].mxu0
    %711 = vmatprep.mubr.f32.mxu0 0.0
    %712 = vmatmul.mubr.f32.gmra.mrb[0].mxu0 %v622
    %v713 = vpop.f32.mrb[0].mxu0
    %v714 = vadd.f32 %v617, %v713
    %v715 = vpop.f32.mrb[0].mxu0
    %716 = vmatprep.mubr.f32.mxu0 0.0
    %717 = vmatmul.mubr.f32.gmra.mrb[0].mxu0 %v625
    %v718 = vpop.f32.mrb[0].mxu0
    %v719 = vadd.f32 %v617, %v718
    %v720 = vpop.f32.mrb[0].mxu0
    %721 = vmatprep.mubr.f32.mxu0 0.0
    %722 = vmatmul.mubr.f32.gmra.mrb[0].mxu0 %v628
    %v723 = vpop.f32.mrb[0].mxu0
    %v724 = vadd.f32 %v617, %v723
    %v725 = vpop.f32.mrb[0].mxu0
    %726 = vmatprep.mubr.f32.mxu0 0.0
    %727 = vmatmul.mubr.f32.gmra.mrb[0].mxu0 %v631
    %v728 = vpop.f32.mrb[0].mxu0
    %v729 = vadd.f32 %v617, %v728
    %v730 = vpop.f32.mrb[0].mxu0
    %731 = vmatprep.mubr.f32.mxu0 0.0
    %732 = vmatmul.mubr.f32.gmra.mrb[0].mxu0 %v634
    %v733 = vpop.f32.mrb[0].mxu0
    %v734 = vadd.f32 %v617, %v733
    %v735 = vpop.f32.mrb[0].mxu0
    %736 = vmatprep.mubr.f32.mxu0 0.0
    %737 = vmatmul.mubr.f32.gmra.mrb[0].mxu0 %v637
    %v738 = vpop.f32.mrb[0].mxu0
    %v739 = vadd.f32 %v617, %v738
    %v740 = vpop.f32.mrb[0].mxu0
    %741 = vmatprep.mubr.f32.mxu0 0.0
    %742 = vmatmul.mubr.f32.gmra.mrb[0].mxu0 %v640
    %v743 = vpop.f32.mrb[0].mxu0
    %v744 = vadd.f32 %v617, %v743
    %v745 = vpop.f32.mrb[0].mxu0
    %746 = vdwg.mxu0
    %747 = vst [vmem:[#allocation5] sm:$0xff] %v709
    %748 = vst [vmem:[#allocation5 + $0x8] sm:$0xff] %v714
    %749 = vst [vmem:[#allocation5 + $0x10] sm:$0xff] %v719
    %750 = vst [vmem:[#allocation5 + $0x18] sm:$0xff] %v724
    %751 = vst [vmem:[#allocation5 + $0x20] sm:$0xff] %v729
    %752 = vst [vmem:[#allocation5 + $0x28] sm:$0xff] %v734
    %753 = vst [vmem:[#allocation5 + $0x30] sm:$0xff] %v739
    %754 = vst [vmem:[#allocation5 + $0x38] sm:$0xff] %v744
    // Predicated region
    $region18: #{tpu_custom_call.1} parent=1 // pred_check
      _
    $region19: #{tpu_custom_call.1} parent=1 // pred_check_branch
      %756 = sbr.rel (0) target = $region21
    $region20: #{tpu_custom_call.1} parent=1 // pred_region
      %s758 = ssub.s32 1024, 1024
      %759 = vsyncadd [#allocation4], %s758
      %s760 = sshll.u32 [#allocation5], 4
      %s761 = int_to_ptr.vmem [resolvable:$true] %s760
      %766 = dma.vmem_to_hbm [thread:$0]  %s761, 1024, %s3, [#allocation4], 128, 128, 8
    $region21: #{tpu_custom_call.1} parent=1 // pred_fallthru
      _
    // Predicated region
    $region22: #{tpu_custom_call.1} parent=1 // pred_check
      _
    $region23: #{tpu_custom_call.1} parent=1 // pred_check_branch
      %768 = sbr.rel (0) target = $region25
    $region24: #{tpu_custom_call.1} parent=1 // pred_region
      %769 = dma.done [#allocation4], 1024
    $region25: #{tpu_custom_call.1} parent=1 // pred_fallthru
      _
    %770 = vsyncpa [#allocation3], 1
    %771 = vsyncpa [#allocation4], 1

</llo_original>
